<compile_context>
chip_gen: v7x
topology: tpu7x:2x2x1
jax: 0.10.0
libtpu: 0.0.40
codegen_flags: <defaults>
</compile_context>

<pallas_src>
import functools

import jax
import jax.numpy as jnp
from jax.experimental import pallas as pl
from jax.experimental.pallas import tpu as pltpu


def _round_up(x, m):
    return -(-x // m) * m


def _head_kernel(
    x_ref,                          # (B, H)      bf16 CLS activations
    dw_ref,                         # (H, H)      bf16 dense weight
    wfused_ref,                     # (H, 4H+Lp)  bf16 = [pw1 | ww1 | ow_pad]
    pw2_ref,                        # (2H, Lp)    bf16 pseudo_head final (padded)
    ww2_ref,                        # (2H, 2H)    bf16 worst_head middle
    ww3_ref,                        # (2H, Lp)    bf16 worst_head final (padded)
    db_ref,                         # (1, H)      f32 dense bias
    fb_ref,                         # (1, 4H+Lp)  f32 = [pb1 | wb1 | ob_pad]
    pb2_ref,                        # (1, Lp)     f32
    wb2_ref,                        # (1, 2H)     f32
    wb3_ref,                        # (1, Lp)     f32
    xout_ref,                       # (B, H)      f32 tanh features
    main_ref,                       # (B, Lp)     f32 out_proj logits (padded)
    pseudo_ref,                     # (B, Lp)     f32 pseudo logits (padded)
    worst_ref,                      # (B, Lp)     f32 worst logits (padded)
    *,
    H,
    Lp,
):
    x0 = x_ref[...]                                          # (B, H) bf16

    # dense + tanh (f32 accumulation on the MXU).
    h = jnp.tanh(
        jnp.dot(x0, dw_ref[...], preferred_element_type=jnp.float32)
        + db_ref[...]
    )                                                        # (B, H) f32
    xout_ref[...] = h.astype(xout_ref.dtype)
    h_bf = h.astype(jnp.bfloat16)

    # One wide fused matmul feeds all three consumers of h.
    fused = (
        jnp.dot(h_bf, wfused_ref[...], preferred_element_type=jnp.float32)
        + fb_ref[...]
    )                                                        # (B, 4H+Lp) f32
    p = jnp.maximum(fused[:, 0:2 * H], 0.0).astype(jnp.bfloat16)       # pseudo ReLU
    w1 = jnp.maximum(fused[:, 2 * H:4 * H], 0.0).astype(jnp.bfloat16)  # worst ReLU

    # out_proj logits (dropout = identity in eval); 128-lane aligned slice/store.
    main_ref[...] = fused[:, 4 * H:4 * H + Lp].astype(main_ref.dtype)

    # pseudo head: ReLU (done) -> Dropout(identity) -> Linear(2H, Lp)
    pseudo_ref[...] = (
        jnp.dot(p, pw2_ref[...], preferred_element_type=jnp.float32)
        + pb2_ref[...]
    ).astype(pseudo_ref.dtype)

    # worst head: GRL forward is identity, so its input is h (consumed above).
    w2 = jnp.maximum(
        jnp.dot(w1, ww2_ref[...], preferred_element_type=jnp.float32)
        + wb2_ref[...],
        0.0,
    ).astype(jnp.bfloat16)
    worst_ref[...] = (
        jnp.dot(w2, ww3_ref[...], preferred_element_type=jnp.float32)
        + wb3_ref[...]
    ).astype(worst_ref.dtype)


def pack_params(params):
    """One-time weight packing (call once at model init, not per forward).

    Fuses the three h-consuming weights, pads num_labels to a 128-lane
    multiple, casts weights to bf16 and keeps biases in f32.
    """
    H = params["dw"].shape[0]
    L = params["ob"].shape[-1]
    Lp = _round_up(max(L, 1), 128)

    def pad_cols(a, width):
        return jnp.pad(a, ((0, 0), (0, width - a.shape[-1])))

    ow_pad = pad_cols(params["ow"], Lp)                      # (H, Lp)
    ob_pad = pad_cols(params["ob"], Lp)                      # (1, Lp)

    wfused = jnp.concatenate(
        [params["pw1"], params["ww1"], ow_pad], axis=1
    ).astype(jnp.bfloat16)                                   # (H, 4H+Lp)
    fb = jnp.concatenate(
        [params["pb1"], params["wb1"], ob_pad], axis=1
    ).astype(jnp.float32)                                    # (1, 4H+Lp)
    assert wfused.shape == (H, 4 * H + Lp)
    assert fb.shape == (1, 4 * H + Lp)

    return {
        "H": H,
        "L": L,
        "Lp": Lp,
        "dw": params["dw"].astype(jnp.bfloat16),             # (H, H)
        "wfused": wfused,                                    # (H, 4H+Lp)
        "pw2": pad_cols(params["pw2"], Lp).astype(jnp.bfloat16),   # (2H, Lp)
        "ww2": params["ww2"].astype(jnp.bfloat16),           # (2H, 2H)
        "ww3": pad_cols(params["ww3"], Lp).astype(jnp.bfloat16),   # (2H, Lp)
        "db": params["db"].astype(jnp.float32),              # (1, H)
        "fb": fb,                                            # (1, 4H+Lp)
        "pb2": pad_cols(params["pb2"], Lp).astype(jnp.float32),    # (1, Lp)
        "wb2": params["wb2"].astype(jnp.float32),            # (1, 2H)
        "wb3": pad_cols(params["wb3"], Lp).astype(jnp.float32),    # (1, Lp)
    }


def roberta_classification_head(features, packed):
    """features: (B, S, H) float32.  packed: output of pack_params()."""
    B, S, H = features.shape
    assert H == packed["H"]
    L, Lp = packed["L"], packed["Lp"]

    # Slice the CLS token BEFORE the dtype cast: only (B, H) bytes move.
    x_cls = features[:, 0, :].astype(jnp.bfloat16)           # (B, H)

    vmem = pl.BlockSpec(memory_space=pltpu.MemorySpace.VMEM)
    out_shape = (
        jax.ShapeDtypeStruct((B, H), jnp.float32),           # x (tanh features)
        jax.ShapeDtypeStruct((B, Lp), jnp.float32),          # main (padded)
        jax.ShapeDtypeStruct((B, Lp), jnp.float32),          # pseudo (padded)
        jax.ShapeDtypeStruct((B, Lp), jnp.float32),          # worst (padded)
    )

    xout, main_p, pseudo_p, worst_p = pl.pallas_call(
        functools.partial(_head_kernel, H=H, Lp=Lp),
        out_shape=out_shape,
        in_specs=[vmem] * 11,
        out_specs=(vmem, vmem, vmem, vmem),
        compiler_params=pltpu.CompilerParams(
            vmem_limit_bytes=32 * 1024 * 1024,
        ),
    )(
        x_cls,
        packed["dw"], packed["wfused"], packed["pw2"], packed["ww2"],
        packed["ww3"],
        packed["db"], packed["fb"], packed["pb2"], packed["wb2"], packed["wb3"],
    )

    # Drop the lane padding (free wrapper-side slices).
    return main_p[:, :L], xout, pseudo_p[:, :L], worst_p[:, :L]


def init_params(key, hidden_size, num_labels):
    """Deterministic synthetic parameters.  All weights stored as (in, out)."""
    H, L = hidden_size, num_labels
    ks = jax.random.split(key, 14)
    s = 0.05

    def w(k, shape):
        return jax.random.normal(k, shape, jnp.float32) * s

    return {
        # dense: Linear(H, H)
        "dw": w(ks[0], (H, H)),        "db": w(ks[1], (1, H)),
        # out_proj: Linear(H, L)
        "ow": w(ks[2], (H, L)),        "ob": w(ks[3], (1, L)),
        # pseudo_head: Linear(H, 2H) -> ReLU -> Dropout -> Linear(2H, L)
        "pw1": w(ks[4], (H, 2 * H)),   "pb1": w(ks[5], (1, 2 * H)),
        "pw2": w(ks[6], (2 * H, L)),   "pb2": w(ks[7], (1, L)),
        # worst_head: Linear(H,2H)->ReLU->Linear(2H,2H)->ReLU->Linear(2H,L)
        "ww1": w(ks[8], (H, 2 * H)),   "wb1": w(ks[9], (1, 2 * H)),
        "ww2": w(ks[10], (2 * H, 2 * H)), "wb2": w(ks[11], (1, 2 * H)),
        "ww3": w(ks[12], (2 * H, L)),  "wb3": w(ks[13], (1, L)),
    }


if __name__ == "__main__":
    B, S, H, L = 2, 8, 32, 2  # batch, seq, hidden_size, num_labels

    key = jax.random.PRNGKey(0)
    k_feat, k_par = jax.random.split(key)
    features = jax.random.normal(k_feat, (B, S, H), jnp.float32)
    params = init_params(k_par, H, L)

    # One-time packing (hoisted out of the per-call path).
    packed = pack_params(params)

    main_out, x_feat, pseudo_out, worst_out = roberta_classification_head(
        features, packed
    )
    jax.block_until_ready((main_out, x_feat, pseudo_out, worst_out))

    # Sanity check against a pure-JAX reference using the same bf16-cast
    # weights/inputs (f32 intermediates), so tolerance reflects only the
    # in-kernel bf16 intermediate casts + MXU accumulation order.
    def bf(a):
        return a.astype(jnp.bfloat16).astype(jnp.float32)

    x0 = bf(features[:, 0, :])
    h_ref = jnp.tanh(x0 @ bf(params["dw"]) + params["db"])
    main_ref = h_ref @ bf(params["ow"]) + params["ob"]
    pseudo_ref = (
        jnp.maximum(h_ref @ bf(params["pw1"]) + params["pb1"], 0.0)
        @ bf(params["pw2"]) + params["pb2"]
    )
    wr = jnp.maximum(h_ref @ bf(params["ww1"]) + params["wb1"], 0.0)
    wr = jnp.maximum(wr @ bf(params["ww2"]) + params["wb2"], 0.0)
    worst_ref = wr @ bf(params["ww3"]) + params["wb3"]

    assert jnp.allclose(x_feat, h_ref, atol=1e-2)
    assert jnp.allclose(main_out, main_ref, atol=1e-2)
    assert jnp.allclose(pseudo_out, pseudo_ref, atol=1e-2)
    assert jnp.allclose(worst_out, worst_ref, atol=1e-2)

    assert main_out.shape == (B, L) and pseudo_out.shape == (B, L)
    assert worst_out.shape == (B, L) and x_feat.shape == (B, H)

    print("KERNEL_OK")
</pallas_src>

<mosaic_0001>
module attributes {stable_mosaic.version = 11 : i64} {
  func.func @_head_kernel(%arg0: memref<2x32xbf16, #tpu.memory_space<vmem>>, %arg1: memref<32x32xbf16, #tpu.memory_space<vmem>>, %arg2: memref<32x256xbf16, #tpu.memory_space<vmem>>, %arg3: memref<64x128xbf16, #tpu.memory_space<vmem>>, %arg4: memref<64x64xbf16, #tpu.memory_space<vmem>>, %arg5: memref<64x128xbf16, #tpu.memory_space<vmem>>, %arg6: memref<1x32xf32, #tpu.memory_space<vmem>>, %arg7: memref<1x256xf32, #tpu.memory_space<vmem>>, %arg8: memref<1x128xf32, #tpu.memory_space<vmem>>, %arg9: memref<1x64xf32, #tpu.memory_space<vmem>>, %arg10: memref<1x128xf32, #tpu.memory_space<vmem>>, %arg11: memref<2x32xf32, #tpu.memory_space<vmem>>, %arg12: memref<2x128xf32, #tpu.memory_space<vmem>>, %arg13: memref<2x128xf32, #tpu.memory_space<vmem>>, %arg14: memref<2x128xf32, #tpu.memory_space<vmem>>) attributes {dimension_semantics = [], scalar_prefetch = 0 : i64, scratch_operands = 0 : i64, tpu.core_type = #tpu.core_type<tc>} {
    %c0 = arith.constant 0 : index
    %c0_0 = arith.constant 0 : index
    %0 = vector.load %arg0[%c0, %c0_0] : memref<2x32xbf16, #tpu.memory_space<vmem>>, vector<2x32xbf16>
    %c0_1 = arith.constant 0 : index
    %c0_2 = arith.constant 0 : index
    %1 = vector.load %arg1[%c0_1, %c0_2] : memref<32x32xbf16, #tpu.memory_space<vmem>>, vector<32x32xbf16>
    %cst = arith.constant dense<0.000000e+00> : vector<2x32xf32>
    %2 = tpu.matmul %0, %1, %cst {dimension_numbers = #tpu.dot_dimension_numbers<[1], [0], [0], [1], [0, 0, 1, 1], [], []>} : vector<2x32xbf16>, vector<32x32xbf16>, vector<2x32xf32> -> vector<2x32xf32>
    %c0_3 = arith.constant 0 : index
    %c0_4 = arith.constant 0 : index
    %3 = vector.load %arg6[%c0_3, %c0_4] : memref<1x32xf32, #tpu.memory_space<vmem>>, vector<1x32xf32>
    %4 = vector.broadcast %3 : vector<1x32xf32> to vector<2x32xf32>
    %5 = arith.addf %2, %4 : vector<2x32xf32>
    %6 = math.tanh %5 : vector<2x32xf32>
    %c0_5 = arith.constant 0 : index
    %c0_6 = arith.constant 0 : index
    %7 = vector.load %arg11[%c0_5, %c0_6] : memref<2x32xf32, #tpu.memory_space<vmem>>, vector<2x32xf32>
    tpu.vector_store %arg11[%c0_5, %c0_6], %6 {strides = array<i32>} : memref<2x32xf32, #tpu.memory_space<vmem>>, vector<2x32xf32>,
    %8 = arith.truncf %6 : vector<2x32xf32> to vector<2x32xbf16>
    %c0_7 = arith.constant 0 : index
    %c0_8 = arith.constant 0 : index
    %9 = vector.load %arg2[%c0_7, %c0_8] : memref<32x256xbf16, #tpu.memory_space<vmem>>, vector<32x256xbf16>
    %cst_9 = arith.constant dense<0.000000e+00> : vector<2x256xf32>
    %10 = tpu.matmul %8, %9, %cst_9 {dimension_numbers = #tpu.dot_dimension_numbers<[1], [0], [0], [1], [0, 0, 1, 1], [], []>} : vector<2x32xbf16>, vector<32x256xbf16>, vector<2x256xf32> -> vector<2x256xf32>
    %c0_10 = arith.constant 0 : index
    %c0_11 = arith.constant 0 : index
    %11 = vector.load %arg7[%c0_10, %c0_11] : memref<1x256xf32, #tpu.memory_space<vmem>>, vector<1x256xf32>
    %12 = vector.broadcast %11 : vector<1x256xf32> to vector<2x256xf32>
    %13 = arith.addf %10, %12 : vector<2x256xf32>
    %14 = vector.extract_strided_slice %13 {offsets = [0, 0], sizes = [2, 64], strides = [1, 1]} : vector<2x256xf32> to vector<2x64xf32>
    %cst_12 = arith.constant 0.000000e+00 : f32
    %15 = vector.broadcast %cst_12 : f32 to vector<2x64xf32>
    %16 = arith.maximumf %14, %15 : vector<2x64xf32>
    %17 = arith.truncf %16 : vector<2x64xf32> to vector<2x64xbf16>
    %18 = vector.extract_strided_slice %13 {offsets = [0, 64], sizes = [2, 64], strides = [1, 1]} : vector<2x256xf32> to vector<2x64xf32>
    %cst_13 = arith.constant 0.000000e+00 : f32
    %19 = vector.broadcast %cst_13 : f32 to vector<2x64xf32>
    %20 = arith.maximumf %18, %19 : vector<2x64xf32>
    %21 = arith.truncf %20 : vector<2x64xf32> to vector<2x64xbf16>
    %22 = vector.extract_strided_slice %13 {offsets = [0, 128], sizes = [2, 128], strides = [1, 1]} : vector<2x256xf32> to vector<2x128xf32>
    %c0_14 = arith.constant 0 : index
    %c0_15 = arith.constant 0 : index
    %23 = vector.load %arg12[%c0_14, %c0_15] : memref<2x128xf32, #tpu.memory_space<vmem>>, vector<2x128xf32>
    tpu.vector_store %arg12[%c0_14, %c0_15], %22 {strides = array<i32>} : memref<2x128xf32, #tpu.memory_space<vmem>>, vector<2x128xf32>,
    %c0_16 = arith.constant 0 : index
    %c0_17 = arith.constant 0 : index
    %24 = vector.load %arg3[%c0_16, %c0_17] : memref<64x128xbf16, #tpu.memory_space<vmem>>, vector<64x128xbf16>
    %cst_18 = arith.constant dense<0.000000e+00> : vector<2x128xf32>
    %25 = tpu.matmul %17, %24, %cst_18 {dimension_numbers = #tpu.dot_dimension_numbers<[1], [0], [0], [1], [0, 0, 1, 1], [], []>} : vector<2x64xbf16>, vector<64x128xbf16>, vector<2x128xf32> -> vector<2x128xf32>
    %c0_19 = arith.constant 0 : index
    %c0_20 = arith.constant 0 : index
    %26 = vector.load %arg8[%c0_19, %c0_20] : memref<1x128xf32, #tpu.memory_space<vmem>>, vector<1x128xf32>
    %27 = vector.broadcast %26 : vector<1x128xf32> to vector<2x128xf32>
    %28 = arith.addf %25, %27 : vector<2x128xf32>
    %c0_21 = arith.constant 0 : index
    %c0_22 = arith.constant 0 : index
    %29 = vector.load %arg13[%c0_21, %c0_22] : memref<2x128xf32, #tpu.memory_space<vmem>>, vector<2x128xf32>
    tpu.vector_store %arg13[%c0_21, %c0_22], %28 {strides = array<i32>} : memref<2x128xf32, #tpu.memory_space<vmem>>, vector<2x128xf32>,
    %c0_23 = arith.constant 0 : index
    %c0_24 = arith.constant 0 : index
    %30 = vector.load %arg4[%c0_23, %c0_24] : memref<64x64xbf16, #tpu.memory_space<vmem>>, vector<64x64xbf16>
    %cst_25 = arith.constant dense<0.000000e+00> : vector<2x64xf32>
    %31 = tpu.matmul %21, %30, %cst_25 {dimension_numbers = #tpu.dot_dimension_numbers<[1], [0], [0], [1], [0, 0, 1, 1], [], []>} : vector<2x64xbf16>, vector<64x64xbf16>, vector<2x64xf32> -> vector<2x64xf32>
    %c0_26 = arith.constant 0 : index
    %c0_27 = arith.constant 0 : index
    %32 = vector.load %arg9[%c0_26, %c0_27] : memref<1x64xf32, #tpu.memory_space<vmem>>, vector<1x64xf32>
    %33 = vector.broadcast %32 : vector<1x64xf32> to vector<2x64xf32>
    %34 = arith.addf %31, %33 : vector<2x64xf32>
    %cst_28 = arith.constant 0.000000e+00 : f32
    %35 = vector.broadcast %cst_28 : f32 to vector<2x64xf32>
    %36 = arith.maximumf %34, %35 : vector<2x64xf32>
    %37 = arith.truncf %36 : vector<2x64xf32> to vector<2x64xbf16>
    %c0_29 = arith.constant 0 : index
    %c0_30 = arith.constant 0 : index
    %38 = vector.load %arg5[%c0_29, %c0_30] : memref<64x128xbf16, #tpu.memory_space<vmem>>, vector<64x128xbf16>
    %cst_31 = arith.constant dense<0.000000e+00> : vector<2x128xf32>
    %39 = tpu.matmul %37, %38, %cst_31 {dimension_numbers = #tpu.dot_dimension_numbers<[1], [0], [0], [1], [0, 0, 1, 1], [], []>} : vector<2x64xbf16>, vector<64x128xbf16>, vector<2x128xf32> -> vector<2x128xf32>
    %c0_32 = arith.constant 0 : index
    %c0_33 = arith.constant 0 : index
    %40 = vector.load %arg10[%c0_32, %c0_33] : memref<1x128xf32, #tpu.memory_space<vmem>>, vector<1x128xf32>
    %41 = vector.broadcast %40 : vector<1x128xf32> to vector<2x128xf32>
    %42 = arith.addf %39, %41 : vector<2x128xf32>
    %c0_34 = arith.constant 0 : index
    %c0_35 = arith.constant 0 : index
    %43 = vector.load %arg14[%c0_34, %c0_35] : memref<2x128xf32, #tpu.memory_space<vmem>>, vector<2x128xf32>
    tpu.vector_store %arg14[%c0_34, %c0_35], %42 {strides = array<i32>} : memref<2x128xf32, #tpu.memory_space<vmem>>, vector<2x128xf32>,
    return
  }
}

</mosaic_0001>

<llo_original>
// kernel: tpu_custom_call.1
$region0: #{tpu_custom_call.1}
  #allocation0 [shape = 'u32[]', space=smem, size = 0x4, offset = 0x4, fixed_abs, tag = 'smem constant byte address 0x4 - core index']
  #allocation1 [shape = 'u32[144,128]{1,0:T(1,128)}', space=vmem, size = 0x12000, scoped, tag = 'internal scratch']
  %s0 = inlined_call_operand.hbm [shape: bf16[2,32], index: 0, kind: input, shape index: {}]
  %s1 = inlined_call_operand.hbm [shape: bf16[32,32], index: 1, kind: input, shape index: {}]
  %s2 = inlined_call_operand.hbm [shape: bf16[32,256], index: 2, kind: input, shape index: {}]
  %s3 = inlined_call_operand.hbm [shape: bf16[64,128], index: 3, kind: input, shape index: {}]
  %s4 = inlined_call_operand.hbm [shape: bf16[64,64], index: 4, kind: input, shape index: {}]
  %s5 = inlined_call_operand.hbm [shape: bf16[64,128], index: 5, kind: input, shape index: {}]
  %s6 = inlined_call_operand.vmem [shape: f32[1,32], index: 6, kind: input, shape index: {}]
  %s7 = inlined_call_operand.vmem [shape: f32[1,256], index: 7, kind: input, shape index: {}]
  %s8 = inlined_call_operand.vmem [shape: f32[1,128], index: 8, kind: input, shape index: {}]
  %s9 = inlined_call_operand.vmem [shape: f32[1,64], index: 9, kind: input, shape index: {}]
  %s10 = inlined_call_operand.vmem [shape: f32[1,128], index: 10, kind: input, shape index: {}]
  %s11 = inlined_call_operand.hbm [shape: f32[2,32], index: 11, kind: output, shape index: {0}]
  %s12 = inlined_call_operand.hbm [shape: f32[2,128], index: 12, kind: output, shape index: {1}]
  %s13 = inlined_call_operand.hbm [shape: f32[2,128], index: 13, kind: output, shape index: {2}]
  %s14 = inlined_call_operand.hbm [shape: f32[2,128], index: 14, kind: output, shape index: {3}]
  %15 = xla_tuple %s11, %s12, %s13, %s14
  %s16 = sld [smem:[#allocation0]]
  $region102: #{tpu_custom_call.1} parent=0
    _
  %s18 = ssub.s32 1, %s16
  %s19 = scalar_select 0, %s18, %s16
  $region1: #{tpu_custom_call.1} parent=0
    #allocation2 [shape = 'u8[512]{0}', space=vmem, size = 0x400, scoped, tag = 'input window, operand 0, single buffered']
    #allocation3 [shape = 's32[1]{0}', space=sflag, size = 0x4, scoped, tag = 'scoped memory for tpu_custom_call.1']
    #allocation4 [shape = 's32[1]{0}', space=sflag, size = 0x4, scoped, tag = 'scoped memory for tpu_custom_call.1']
    #allocation5 [shape = 'u8[8192]{0}', space=vmem, size = 0x2000, scoped, tag = 'input window, operand 1, single buffered']
    #allocation6 [shape = 's32[1]{0}', space=sflag, size = 0x4, scoped, tag = 'scoped memory for tpu_custom_call.1']
    #allocation7 [shape = 'u8[16384]{0}', space=vmem, size = 0x4000, scoped, tag = 'input window, operand 2, single buffered']
    #allocation8 [shape = 'u8[16384]{0}', space=vmem, size = 0x4000, scoped, tag = 'input window, operand 3, single buffered']
    #allocation9 [shape = 's32[1]{0}', space=sflag, size = 0x4, scoped, tag = 'scoped memory for tpu_custom_call.1']
    #allocation10 [shape = 'u8[16384]{0}', space=vmem, size = 0x4000, scoped, tag = 'input window, operand 4, single buffered']
    #allocation11 [shape = 'u8[16384]{0}', space=vmem, size = 0x4000, scoped, tag = 'input window, operand 5, single buffered']
    #allocation12 [shape = 's32[1]{0}', space=sflag, size = 0x4, scoped, tag = 'scoped memory for tpu_custom_call.1']
    #allocation13 [shape = 'u8[1024]{0}', space=vmem, size = 0x400, scoped, tag = 'output window, operand 0, single buffered']
    #allocation14 [shape = 'u8[1024]{0}', space=vmem, size = 0x400, scoped, tag = 'output window, operand 1, single buffered']
    #allocation15 [shape = 's32[1]{0}', space=sflag, size = 0x4, scoped, tag = 'scoped memory for tpu_custom_call.1']
    #allocation16 [shape = 'u8[1024]{0}', space=vmem, size = 0x400, scoped, tag = 'output window, operand 2, single buffered']
    #allocation17 [shape = 'u8[1024]{0}', space=vmem, size = 0x400, scoped, tag = 'output window, operand 3, single buffered']
    #allocation18 [shape = 's32[1]{0}', space=sflag, size = 0x4, scoped, tag = 'scoped memory for tpu_custom_call.1']
    %20 = vsyncpa [#allocation3], 0
    %21 = vsyncpa [#allocation6], 0
    %22 = vsyncpa [#allocation9], 0
    %23 = vsyncpa [#allocation12], 0
    %24 = vsyncpa [#allocation4], 0
    %25 = vsyncpa [#allocation15], 0
    %26 = vsyncpa [#allocation18], 0
    // Predicated region
    $region2: #{tpu_custom_call.1} parent=1 // pred_check
      _
    $region3: #{tpu_custom_call.1} parent=1 // pred_check_branch
      %28 = sbr.rel (0) target = $region5
    $region4: #{tpu_custom_call.1} parent=1 // pred_region
      %s30 = ssub.s32 16, 16
      %31 = vsyncadd [#allocation3], %s30
      %s33 = sshll.u32 [#allocation2], 4
      %s34 = int_to_ptr.vmem [resolvable:$true] %s33
      %36 = dma.hbm_to_vmem [thread:$0]  %s0, 16, %s34, [#allocation3]
    $region5: #{tpu_custom_call.1} parent=1 // pred_fallthru
      _
    // Predicated region
    $region6: #{tpu_custom_call.1} parent=1 // pred_check
      _
    $region7: #{tpu_custom_call.1} parent=1 // pred_check_branch
      %38 = sbr.rel (0) target = $region9
    $region8: #{tpu_custom_call.1} parent=1 // pred_region
      %s40 = ssub.s32 256, 256
      %41 = vsyncadd [#allocation6], %s40
      %s42 = sshll.u32 [#allocation5], 4
      %s43 = int_to_ptr.vmem [resolvable:$true] %s42
      %48 = dma.hbm_to_vmem [thread:$0]  %s1, 256, %s43, [#allocation6], 64, 64, 4
    $region9: #{tpu_custom_call.1} parent=1 // pred_fallthru
      _
    // Predicated region
    $region10: #{tpu_custom_call.1} parent=1 // pred_check
      _
    $region11: #{tpu_custom_call.1} parent=1 // pred_check_branch
      %50 = sbr.rel (0) target = $region13
    $region12: #{tpu_custom_call.1} parent=1 // pred_region
      %s52 = ssub.s32 512, 512
      %53 = vsyncadd [#allocation6], %s52
      %s54 = sshll.u32 [#allocation7], 4
      %s55 = int_to_ptr.vmem [resolvable:$true] %s54
      %60 = dma.hbm_to_vmem [thread:$0]  %s2, 512, %s55, [#allocation6], 128, 128, 8
    $region13: #{tpu_custom_call.1} parent=1 // pred_fallthru
      _
    // Predicated region
    $region14: #{tpu_custom_call.1} parent=1 // pred_check
      _
    $region15: #{tpu_custom_call.1} parent=1 // pred_check_branch
      %62 = sbr.rel (0) target = $region17
    $region16: #{tpu_custom_call.1} parent=1 // pred_region
      %s64 = ssub.s32 512, 512
      %65 = vsyncadd [#allocation9], %s64
      %s66 = sshll.u32 [#allocation8], 4
      %s67 = int_to_ptr.vmem [resolvable:$true] %s66
      %72 = dma.hbm_to_vmem [thread:$0]  %s3, 512, %s67, [#allocation9], 64, 64, 4
    $region17: #{tpu_custom_call.1} parent=1 // pred_fallthru
      _
    // Predicated region
    $region18: #{tpu_custom_call.1} parent=1 // pred_check
      _
    $region19: #{tpu_custom_call.1} parent=1 // pred_check_branch
      %74 = sbr.rel (0) target = $region21
    $region20: #{tpu_custom_call.1} parent=1 // pred_region
      %s76 = ssub.s32 512, 512
      %77 = vsyncadd [#allocation9], %s76
      %s78 = sshll.u32 [#allocation10], 4
      %s79 = int_to_ptr.vmem [resolvable:$true] %s78
      %84 = dma.hbm_to_vmem [thread:$0]  %s4, 512, %s79, [#allocation9], 64, 64, 4
    $region21: #{tpu_custom_call.1} parent=1 // pred_fallthru
      _
    // Predicated region
    $region22: #{tpu_custom_call.1} parent=1 // pred_check
      _
    $region23: #{tpu_custom_call.1} parent=1 // pred_check_branch
      %86 = sbr.rel (0) target = $region25
    $region24: #{tpu_custom_call.1} parent=1 // pred_region
      %s88 = ssub.s32 512, 512
      %89 = vsyncadd [#allocation12], %s88
      %s90 = sshll.u32 [#allocation11], 4
      %s91 = int_to_ptr.vmem [resolvable:$true] %s90
      %96 = dma.hbm_to_vmem [thread:$0]  %s5, 512, %s91, [#allocation12], 64, 64, 4
    $region25: #{tpu_custom_call.1} parent=1 // pred_fallthru
      _
    // Predicated region
    $region26: #{tpu_custom_call.1} parent=1 // pred_check
      _
    $region27: #{tpu_custom_call.1} parent=1 // pred_check_branch
      %98 = sbr.rel (0) target = $region29
    $region28: #{tpu_custom_call.1} parent=1 // pred_region
      _
    $region29: #{tpu_custom_call.1} parent=1 // pred_fallthru
      _
    // Predicated region
    $region30: #{tpu_custom_call.1} parent=1 // pred_check
      _
    $region31: #{tpu_custom_call.1} parent=1 // pred_check_branch
      %100 = sbr.rel (0) target = $region33
    $region32: #{tpu_custom_call.1} parent=1 // pred_region
      _
    $region33: #{tpu_custom_call.1} parent=1 // pred_fallthru
      _
    // Predicated region
    $region34: #{tpu_custom_call.1} parent=1 // pred_check
      _
    $region35: #{tpu_custom_call.1} parent=1 // pred_check_branch
      %102 = sbr.rel (0) target = $region37
    $region36: #{tpu_custom_call.1} parent=1 // pred_region
      _
    $region37: #{tpu_custom_call.1} parent=1 // pred_fallthru
      _
    // Predicated region
    $region38: #{tpu_custom_call.1} parent=1 // pred_check
      _
    $region39: #{tpu_custom_call.1} parent=1 // pred_check_branch
      %104 = sbr.rel (0) target = $region41
    $region40: #{tpu_custom_call.1} parent=1 // pred_region
      _
    $region41: #{tpu_custom_call.1} parent=1 // pred_fallthru
      _
    // Predicated region
    $region42: #{tpu_custom_call.1} parent=1 // pred_check
      _
    $region43: #{tpu_custom_call.1} parent=1 // pred_check_branch
      %106 = sbr.rel (0) target = $region45
    $region44: #{tpu_custom_call.1} parent=1 // pred_region
      _
    $region45: #{tpu_custom_call.1} parent=1 // pred_fallthru
      _
    // Predicated region
    $region46: #{tpu_custom_call.1} parent=1 // pred_check
      _
    $region47: #{tpu_custom_call.1} parent=1 // pred_check_branch
      %108 = sbr.rel (0) target = $region49
    $region48: #{tpu_custom_call.1} parent=1 // pred_region
      %109 = dma.done [#allocation3], 16
    $region49: #{tpu_custom_call.1} parent=1 // pred_fallthru
      _
    // Predicated region
    $region50: #{tpu_custom_call.1} parent=1 // pred_check
      _
    $region51: #{tpu_custom_call.1} parent=1 // pred_check_branch
      %111 = sbr.rel (0) target = $region53
    $region52: #{tpu_custom_call.1} parent=1 // pred_region
      %112 = dma.done [#allocation6], 256
    $region53: #{tpu_custom_call.1} parent=1 // pred_fallthru
      _
    // Predicated region
    $region54: #{tpu_custom_call.1} parent=1 // pred_check
      _
    $region55: #{tpu_custom_call.1} parent=1 // pred_check_branch
      %114 = sbr.rel (0) target = $region57
    $region56: #{tpu_custom_call.1} parent=1 // pred_region
      %115 = dma.done [#allocation6], 512
    $region57: #{tpu_custom_call.1} parent=1 // pred_fallthru
      _
    // Predicated region
    $region58: #{tpu_custom_call.1} parent=1 // pred_check
      _
    $region59: #{tpu_custom_call.1} parent=1 // pred_check_branch
      %117 = sbr.rel (0) target = $region61
    $region60: #{tpu_custom_call.1} parent=1 // pred_region
      %118 = dma.done [#allocation9], 512
    $region61: #{tpu_custom_call.1} parent=1 // pred_fallthru
      _
    // Predicated region
    $region62: #{tpu_custom_call.1} parent=1 // pred_check
      _
    $region63: #{tpu_custom_call.1} parent=1 // pred_check_branch
      %120 = sbr.rel (0) target = $region65
    $region64: #{tpu_custom_call.1} parent=1 // pred_region
      %121 = dma.done [#allocation9], 512
    $region65: #{tpu_custom_call.1} parent=1 // pred_fallthru
      _
    // Predicated region
    $region66: #{tpu_custom_call.1} parent=1 // pred_check
      _
    $region67: #{tpu_custom_call.1} parent=1 // pred_check_branch
      %123 = sbr.rel (0) target = $region69
    $region68: #{tpu_custom_call.1} parent=1 // pred_region
      %124 = dma.done [#allocation12], 512
    $region69: #{tpu_custom_call.1} parent=1 // pred_fallthru
      _
    %v126 = vld [vmem:[#allocation2] sm:$0x1]
    %v127 = vld [vmem:[#allocation5] sm:$0xf]
    %v128 = vld [vmem:[#allocation5 + $0x4] sm:$0xf]
    %v129 = vld [vmem:[#allocation5 + $0x8] sm:$0xf]
    %v130 = vld [vmem:[#allocation5 + $0xc] sm:$0xf]
    %v131 = vld [vmem:[%s6] sm:$0x1]
    %v133 = vlaneseq
    %v134 = vshrl.u32 %v133, 7
    %v135 = vsub.s32 0, %v134
    %v136 = vrot.slane %v131, %v135
    %v142 = vunpack.c.l.b16 %v127
    %v143 = vunpack.c.l.b16 %v128
    %v144 = vunpack.c.l.b16 %v129
    %v145 = vunpack.c.l.b16 %v130
    %v146 = vpack.c.b16 %v143, %v142
    %v147 = vpack.c.b16 %v145, %v144
    %vm150 = vcmask 261120
    %v152 = vsel %vm150, %v126, 0
    %154 = vmatprep.subr.bf16.mxu0 0
    %155 = vmatpush1.bf16.msra.mxu0 %v146
    %156 = vmatprep.subr.bf16.mxu0 0
    %157 = vmatpush1.bf16.msra.mxu0 %v147
    %158 = vmatprep.subr.bf16.mxu0 0
    %159 = vmatpush1.bf16.msra.mxu0 0
    %160 = vmatprep.subr.bf16.mxu0 0
    %161 = vmatpush1.bf16.msra.mxu0 0
    %162 = vmatprep.subr.bf16.mxu0 0
    %163 = vmatpush1.bf16.msra.mxu0 0
    %164 = vmatprep.subr.bf16.mxu0 0
    %165 = vmatpush1.bf16.msra.mxu0 0
    %166 = vmatprep.subr.bf16.mxu0 0
    %167 = vmatpush1.bf16.msra.mxu0 0
    %168 = vmatprep.subr.bf16.mxu0 0
    %169 = vmatpush1.bf16.msra.mxu0 0
    %170 = vmatprep.subr.bf16.mxu0 0
    %171 = vmatpush1.bf16.msra.mxu0 0
    %172 = vmatprep.subr.bf16.mxu0 0
    %173 = vmatpush1.bf16.msra.mxu0 0
    %174 = vmatprep.subr.bf16.mxu0 0
    %175 = vmatpush1.bf16.msra.mxu0 0
    %176 = vmatprep.subr.bf16.mxu0 0
    %177 = vmatpush1.bf16.msra.mxu0 0
    %178 = vmatprep.subr.bf16.mxu0 0
    %179 = vmatpush1.bf16.msra.mxu0 0
    %180 = vmatprep.subr.bf16.mxu0 0
    %181 = vmatpush1.bf16.msra.mxu0 0
    %182 = vmatprep.subr.bf16.mxu0 0
    %183 = vmatpush1.bf16.msra.mxu0 0
    %184 = vmatprep.subr.bf16.mxu0 0
    %185 = vmatpush1.bf16.msra.mxu0 0
    %186 = vmatprep.mubr.bf16.mxu0 0
    %187 = vmatmul.mubr.bf16.gmra.mrb[0].mxu0 %v152
    %v188 = vpop.f32.mrb[0].mxu0
    %v189 = vadd.f32 %v136, %v188
    %v190 = vpop.f32.mrb[0].mxu0
    %v191 = vpop.f32.mrb[0].mxu0
    %v192 = vpop.f32.mrb[0].mxu0
    %193 = vdwg.mxu0
    %v194 = vtanh.pop %v189
    %vm195 = vcmask 254976
    %196 = vst.msk [vmem:[#allocation13] sm:$0x3] %vm195, %v194
    %v197 = vpack.c.bf16 %v194, %v194
    %v198 = vld [vmem:[#allocation7] sm:$0xff]
    %v199 = vld [vmem:[#allocation7 + $0x8] sm:$0xff]
    %v200 = vld [vmem:[#allocation7 + $0x10] sm:$0xff]
    %v201 = vld [vmem:[#allocation7 + $0x18] sm:$0xff]
    %v202 = vld [vmem:[%s7] sm:$0x3]
    %v204 = vlaneseq
    %v205 = vshrl.u32 %v204, 7
    %v206 = vsub.s32 0, %v205
    %v207 = vrot.slane %v202, %v206
    %v208 = vlaneseq
    %v209 = vshrl.u32 %v208, 7
    %v210 = vsub.s32 1, %v209
    %v211 = vrot.slane %v202, %v210
    %v218 = vunpack.c.l.b16 %v198
    %v219 = vunpack.c.h.b16 %v198
    %v220 = vunpack.c.l.b16 %v199
    %v221 = vunpack.c.h.b16 %v199
    %v222 = vunpack.c.l.b16 %v200
    %v223 = vunpack.c.h.b16 %v200
    %v224 = vunpack.c.l.b16 %v201
    %v225 = vunpack.c.h.b16 %v201
    %v226 = vpack.c.b16 %v220, %v218
    %v227 = vpack.c.b16 %v221, %v219
    %v228 = vpack.c.b16 %v224, %v222
    %v229 = vpack.c.b16 %v225, %v223
    %v235 = vsel %vm150, %v197, 0
    %237 = vmatprep.subr.bf16.mxu0 %v227
    %238 = vmatpush1.bf16.msra.mxu0 %v226
    %239 = vmatprep.subr.bf16.mxu0 %v229
    %240 = vmatpush1.bf16.msra.mxu0 %v228
    %241 = vmatprep.subr.bf16.mxu0 0
    %242 = vmatpush1.bf16.msra.mxu0 0
    %243 = vmatprep.subr.bf16.mxu0 0
    %244 = vmatpush1.bf16.msra.mxu0 0
    %245 = vmatprep.subr.bf16.mxu0 0
    %246 = vmatpush1.bf16.msra.mxu0 0
    %247 = vmatprep.subr.bf16.mxu0 0
    %248 = vmatpush1.bf16.msra.mxu0 0
    %249 = vmatprep.subr.bf16.mxu0 0
    %250 = vmatpush1.bf16.msra.mxu0 0
    %251 = vmatprep.subr.bf16.mxu0 0
    %252 = vmatpush1.bf16.msra.mxu0 0
    %253 = vmatprep.subr.bf16.mxu0 0
    %254 = vmatpush1.bf16.msra.mxu0 0
    %255 = vmatprep.subr.bf16.mxu0 0
    %256 = vmatpush1.bf16.msra.mxu0 0
    %257 = vmatprep.subr.bf16.mxu0 0
    %258 = vmatpush1.bf16.msra.mxu0 0
    %259 = vmatprep.subr.bf16.mxu0 0
    %260 = vmatpush1.bf16.msra.mxu0 0
    %261 = vmatprep.subr.bf16.mxu0 0
    %262 = vmatpush1.bf16.msra.mxu0 0
    %263 = vmatprep.subr.bf16.mxu0 0
    %264 = vmatpush1.bf16.msra.mxu0 0
    %265 = vmatprep.subr.bf16.mxu0 0
    %266 = vmatpush1.bf16.msra.mxu0 0
    %267 = vmatprep.subr.bf16.mxu0 0
    %268 = vmatpush1.bf16.msra.mxu0 0
    %269 = vmatprep.mubr.bf16.mxu0 0
    %270 = vmatmul.mubr.bf16.gmra.mrb[0].mxu0 %v235
    %v271 = vpop.f32.mrb[0].mxu0
    %v272 = vadd.f32 %v207, %v271
    %v273 = vpop.f32.mrb[0].mxu0
    %v274 = vadd.f32 %v211, %v273
    %v275 = vpop.f32.mrb[0].mxu0
    %v276 = vpop.f32.mrb[0].mxu0
    %277 = vdwg.mxu0
    %v278 = vmax.f32 %v272, 0.0
    %v279 = vpack.c.bf16 %v278, %v278
    %280 = vst [vmem:[#allocation14] sm:$0x3] %v274
    %v281 = vld [vmem:[#allocation8] sm:$0xf]
    %v282 = vld [vmem:[#allocation8 + $0x4] sm:$0xf]
    %v283 = vld [vmem:[#allocation8 + $0x8] sm:$0xf]
    %v284 = vld [vmem:[#allocation8 + $0xc] sm:$0xf]
    %v285 = vld [vmem:[#allocation8 + $0x10] sm:$0xf]
    %v286 = vld [vmem:[#allocation8 + $0x14] sm:$0xf]
    %v287 = vld [vmem:[#allocation8 + $0x18] sm:$0xf]
    %v288 = vld [vmem:[#allocation8 + $0x1c] sm:$0xf]
    %v289 = vld [vmem:[%s8] sm:$0x1]
    %v291 = vlaneseq
    %v292 = vshrl.u32 %v291, 7
    %v293 = vsub.s32 0, %v292
    %v294 = vrot.slane %v289, %v293
    %v304 = vunpack.c.l.b16 %v281
    %v305 = vunpack.c.l.b16 %v282
    %v306 = vunpack.c.l.b16 %v283
    %v307 = vunpack.c.l.b16 %v284
    %v308 = vunpack.c.l.b16 %v285
    %v309 = vunpack.c.l.b16 %v286
    %v310 = vunpack.c.l.b16 %v287
    %v311 = vunpack.c.l.b16 %v288
    %v312 = vpack.c.b16 %v305, %v304
    %v313 = vpack.c.b16 %v307, %v306
    %v314 = vpack.c.b16 %v309, %v308
    %v315 = vpack.c.b16 %v311, %v310
    %vm320 = vcmask 523264
    %v322 = vsel %vm320, %v279, 0
    %324 = vmatprep.subr.bf16.mxu0 0
    %325 = vmatpush1.bf16.msra.mxu0 %v312
    %326 = vmatprep.subr.bf16.mxu0 0
    %327 = vmatpush1.bf16.msra.mxu0 %v313
    %328 = vmatprep.subr.bf16.mxu0 0
    %329 = vmatpush1.bf16.msra.mxu0 %v314
    %330 = vmatprep.subr.bf16.mxu0 0
    %331 = vmatpush1.bf16.msra.mxu0 %v315
    %332 = vmatprep.subr.bf16.mxu0 0
    %333 = vmatpush1.bf16.msra.mxu0 0
    %334 = vmatprep.subr.bf16.mxu0 0
    %335 = vmatpush1.bf16.msra.mxu0 0
    %336 = vmatprep.subr.bf16.mxu0 0
    %337 = vmatpush1.bf16.msra.mxu0 0
    %338 = vmatprep.subr.bf16.mxu0 0
    %339 = vmatpush1.bf16.msra.mxu0 0
    %340 = vmatprep.subr.bf16.mxu0 0
    %341 = vmatpush1.bf16.msra.mxu0 0
    %342 = vmatprep.subr.bf16.mxu0 0
    %343 = vmatpush1.bf16.msra.mxu0 0
    %344 = vmatprep.subr.bf16.mxu0 0
    %345 = vmatpush1.bf16.msra.mxu0 0
    %346 = vmatprep.subr.bf16.mxu0 0
    %347 = vmatpush1.bf16.msra.mxu0 0
    %348 = vmatprep.subr.bf16.mxu0 0
    %349 = vmatpush1.bf16.msra.mxu0 0
    %350 = vmatprep.subr.bf16.mxu0 0
    %351 = vmatpush1.bf16.msra.mxu0 0
    %352 = vmatprep.subr.bf16.mxu0 0
    %353 = vmatpush1.bf16.msra.mxu0 0
    %354 = vmatprep.subr.bf16.mxu0 0
    %355 = vmatpush1.bf16.msra.mxu0 0
    %356 = vmatprep.mubr.bf16.mxu0 0
    %357 = vmatmul.mubr.bf16.gmra.mrb[0].mxu0 %v322
    %v358 = vpop.f32.mrb[0].mxu0
    %v359 = vadd.f32 %v294, %v358
    %v360 = vpop.f32.mrb[0].mxu0
    %v361 = vpop.f32.mrb[0].mxu0
    %v362 = vpop.f32.mrb[0].mxu0
    %363 = vdwg.mxu0
    %364 = vst [vmem:[#allocation16] sm:$0x3] %v359
    %v365 = vld [vmem:[#allocation10] sm:$0xf]
    %v366 = vld [vmem:[#allocation10 + $0x4] sm:$0xf]
    %v367 = vld [vmem:[#allocation10 + $0x8] sm:$0xf]
    %v368 = vld [vmem:[#allocation10 + $0xc] sm:$0xf]
    %v369 = vld [vmem:[#allocation10 + $0x10] sm:$0xf]
    %v370 = vld [vmem:[#allocation10 + $0x14] sm:$0xf]
    %v371 = vld [vmem:[#allocation10 + $0x18] sm:$0xf]
    %v372 = vld [vmem:[#allocation10 + $0x1c] sm:$0xf]
    %v373 = vld [vmem:[%s9] sm:$0x1]
    %v375 = vlaneseq
    %v376 = vshrl.u32 %v375, 7
    %v377 = vsub.s32 0, %v376
    %v378 = vrot.slane %v373, %v377
    %381 = vrot.lane.b32.xlu0 %v279, 64
    %v382 = vpop.permute.xlu0 %381
    %v391 = vunpack.c.l.b16 %v365
    %v392 = vunpack.c.l.b16 %v366
    %v393 = vunpack.c.l.b16 %v367
    %v394 = vunpack.c.l.b16 %v368
    %v395 = vunpack.c.l.b16 %v369
    %v396 = vunpack.c.l.b16 %v370
    %v397 = vunpack.c.l.b16 %v371
    %v398 = vunpack.c.l.b16 %v372
    %v399 = vpack.c.b16 %v392, %v391
    %v400 = vpack.c.b16 %v394, %v393
    %v401 = vpack.c.b16 %v396, %v395
    %v402 = vpack.c.b16 %v398, %v397
    %v408 = vsel %vm320, %v382, 0
    %410 = vmatprep.subr.bf16.mxu0 0
    %411 = vmatpush1.bf16.msra.mxu0 %v399
    %412 = vmatprep.subr.bf16.mxu0 0
    %413 = vmatpush1.bf16.msra.mxu0 %v400
    %414 = vmatprep.subr.bf16.mxu0 0
    %415 = vmatpush1.bf16.msra.mxu0 %v401
    %416 = vmatprep.subr.bf16.mxu0 0
    %417 = vmatpush1.bf16.msra.mxu0 %v402
    %418 = vmatprep.subr.bf16.mxu0 0
    %419 = vmatpush1.bf16.msra.mxu0 0
    %420 = vmatprep.subr.bf16.mxu0 0
    %421 = vmatpush1.bf16.msra.mxu0 0
    %422 = vmatprep.subr.bf16.mxu0 0
    %423 = vmatpush1.bf16.msra.mxu0 0
    %424 = vmatprep.subr.bf16.mxu0 0
    %425 = vmatpush1.bf16.msra.mxu0 0
    %426 = vmatprep.subr.bf16.mxu0 0
    %427 = vmatpush1.bf16.msra.mxu0 0
    %428 = vmatprep.subr.bf16.mxu0 0
    %429 = vmatpush1.bf16.msra.mxu0 0
    %430 = vmatprep.subr.bf16.mxu0 0
    %431 = vmatpush1.bf16.msra.mxu0 0
    %432 = vmatprep.subr.bf16.mxu0 0
    %433 = vmatpush1.bf16.msra.mxu0 0
    %434 = vmatprep.subr.bf16.mxu0 0
    %435 = vmatpush1.bf16.msra.mxu0 0
    %436 = vmatprep.subr.bf16.mxu0 0
    %437 = vmatpush1.bf16.msra.mxu0 0
    %438 = vmatprep.subr.bf16.mxu0 0
    %439 = vmatpush1.bf16.msra.mxu0 0
    %440 = vmatprep.subr.bf16.mxu0 0
    %441 = vmatpush1.bf16.msra.mxu0 0
    %442 = vmatprep.mubr.bf16.mxu0 0
    %443 = vmatmul.mubr.bf16.gmra.mrb[0].mxu0 %v408
    %v444 = vpop.f32.mrb[0].mxu0
    %v445 = vadd.f32 %v378, %v444
    %v446 = vpop.f32.mrb[0].mxu0
    %v447 = vpop.f32.mrb[0].mxu0
    %v448 = vpop.f32.mrb[0].mxu0
    %449 = vdwg.mxu0
    %v450 = vmax.f32 %v445, 0.0
    %v451 = vpack.c.bf16 %v450, %v450
    %v452 = vld [vmem:[#allocation11] sm:$0xf]
    %v453 = vld [vmem:[#allocation11 + $0x4] sm:$0xf]
    %v454 = vld [vmem:[#allocation11 + $0x8] sm:$0xf]
    %v455 = vld [vmem:[#allocation11 + $0xc] sm:$0xf]
    %v456 = vld [vmem:[#allocation11 + $0x10] sm:$0xf]
    %v457 = vld [vmem:[#allocation11 + $0x14] sm:$0xf]
    %v458 = vld [vmem:[#allocation11 + $0x18] sm:$0xf]
    %v459 = vld [vmem:[#allocation11 + $0x1c] sm:$0xf]
    %v460 = vld [vmem:[%s10] sm:$0x1]
    %v462 = vlaneseq
    %v463 = vshrl.u32 %v462, 7
    %v464 = vsub.s32 0, %v463
    %v465 = vrot.slane %v460, %v464
    %v475 = vunpack.c.l.b16 %v452
    %v476 = vunpack.c.l.b16 %v453
    %v477 = vunpack.c.l.b16 %v454
    %v478 = vunpack.c.l.b16 %v455
    %v479 = vunpack.c.l.b16 %v456
    %v480 = vunpack.c.l.b16 %v457
    %v481 = vunpack.c.l.b16 %v458
    %v482 = vunpack.c.l.b16 %v459
    %v483 = vpack.c.b16 %v476, %v475
    %v484 = vpack.c.b16 %v478, %v477
    %v485 = vpack.c.b16 %v480, %v479
    %v486 = vpack.c.b16 %v482, %v481
    %v492 = vsel %vm320, %v451, 0
    %494 = vmatprep.subr.bf16.mxu0 0
    %495 = vmatpush1.bf16.msra.mxu0 %v483
    %496 = vmatprep.subr.bf16.mxu0 0
    %497 = vmatpush1.bf16.msra.mxu0 %v484
    %498 = vmatprep.subr.bf16.mxu0 0
    %499 = vmatpush1.bf16.msra.mxu0 %v485
    %500 = vmatprep.subr.bf16.mxu0 0
    %501 = vmatpush1.bf16.msra.mxu0 %v486
    %502 = vmatprep.subr.bf16.mxu0 0
    %503 = vmatpush1.bf16.msra.mxu0 0
    %504 = vmatprep.subr.bf16.mxu0 0
    %505 = vmatpush1.bf16.msra.mxu0 0
    %506 = vmatprep.subr.bf16.mxu0 0
    %507 = vmatpush1.bf16.msra.mxu0 0
    %508 = vmatprep.subr.bf16.mxu0 0
    %509 = vmatpush1.bf16.msra.mxu0 0
    %510 = vmatprep.subr.bf16.mxu0 0
    %511 = vmatpush1.bf16.msra.mxu0 0
    %512 = vmatprep.subr.bf16.mxu0 0
    %513 = vmatpush1.bf16.msra.mxu0 0
    %514 = vmatprep.subr.bf16.mxu0 0
    %515 = vmatpush1.bf16.msra.mxu0 0
    %516 = vmatprep.subr.bf16.mxu0 0
    %517 = vmatpush1.bf16.msra.mxu0 0
    %518 = vmatprep.subr.bf16.mxu0 0
    %519 = vmatpush1.bf16.msra.mxu0 0
    %520 = vmatprep.subr.bf16.mxu0 0
    %521 = vmatpush1.bf16.msra.mxu0 0
    %522 = vmatprep.subr.bf16.mxu0 0
    %523 = vmatpush1.bf16.msra.mxu0 0
    %524 = vmatprep.subr.bf16.mxu0 0
    %525 = vmatpush1.bf16.msra.mxu0 0
    %526 = vmatprep.mubr.bf16.mxu0 0
    %527 = vmatmul.mubr.bf16.gmra.mrb[0].mxu0 %v492
    %v528 = vpop.f32.mrb[0].mxu0
    %v529 = vadd.f32 %v465, %v528
    %v530 = vpop.f32.mrb[0].mxu0
    %v531 = vpop.f32.mrb[0].mxu0
    %v532 = vpop.f32.mrb[0].mxu0
    %533 = vdwg.mxu0
    %534 = vst [vmem:[#allocation17] sm:$0x3] %v529
    // Predicated region
    $region70: #{tpu_custom_call.1} parent=1 // pred_check
      _
    $region71: #{tpu_custom_call.1} parent=1 // pred_check_branch
      %536 = sbr.rel (0) target = $region73
    $region72: #{tpu_custom_call.1} parent=1 // pred_region
      %s538 = ssub.s32 32, 32
      %539 = vsyncadd [#allocation4], %s538
      %s541 = sshll.u32 [#allocation13], 4
      %s542 = int_to_ptr.vmem [resolvable:$true] %s541
      %544 = dma.vmem_to_hbm [thread:$0]  %s542, 32, %s11, [#allocation4]
    $region73: #{tpu_custom_call.1} parent=1 // pred_fallthru
      _
    // Predicated region
    $region74: #{tpu_custom_call.1} parent=1 // pred_check
      _
    $region75: #{tpu_custom_call.1} parent=1 // pred_check_branch
      %546 = sbr.rel (0) target = $region77
    $region76: #{tpu_custom_call.1} parent=1 // pred_region
      %s548 = ssub.s32 32, 32
      %549 = vsyncadd [#allocation15], %s548
      %s551 = sshll.u32 [#allocation14], 4
      %s552 = int_to_ptr.vmem [resolvable:$true] %s551
      %554 = dma.vmem_to_hbm [thread:$0]  %s552, 32, %s12, [#allocation15]
    $region77: #{tpu_custom_call.1} parent=1 // pred_fallthru
      _
    // Predicated region
    $region78: #{tpu_custom_call.1} parent=1 // pred_check
      _
    $region79: #{tpu_custom_call.1} parent=1 // pred_check_branch
      %556 = sbr.rel (0) target = $region81
    $region80: #{tpu_custom_call.1} parent=1 // pred_region
      %s558 = ssub.s32 32, 32
      %559 = vsyncadd [#allocation15], %s558
      %s561 = sshll.u32 [#allocation16], 4
      %s562 = int_to_ptr.vmem [resolvable:$true] %s561
      %564 = dma.vmem_to_hbm [thread:$0]  %s562, 32, %s13, [#allocation15]
    $region81: #{tpu_custom_call.1} parent=1 // pred_fallthru
      _
    // Predicated region
    $region82: #{tpu_custom_call.1} parent=1 // pred_check
      _
    $region83: #{tpu_custom_call.1} parent=1 // pred_check_branch
      %566 = sbr.rel (0) target = $region85
    $region84: #{tpu_custom_call.1} parent=1 // pred_region
      %s568 = ssub.s32 32, 32
      %569 = vsyncadd [#allocation18], %s568
      %s571 = sshll.u32 [#allocation17], 4
      %s572 = int_to_ptr.vmem [resolvable:$true] %s571
      %574 = dma.vmem_to_hbm [thread:$0]  %s572, 32, %s14, [#allocation18]
    $region85: #{tpu_custom_call.1} parent=1 // pred_fallthru
      _
    // Predicated region
    $region86: #{tpu_custom_call.1} parent=1 // pred_check
      _
    $region87: #{tpu_custom_call.1} parent=1 // pred_check_branch
      %576 = sbr.rel (0) target = $region89
    $region88: #{tpu_custom_call.1} parent=1 // pred_region
      %577 = dma.done [#allocation4], 32
    $region89: #{tpu_custom_call.1} parent=1 // pred_fallthru
      _
    // Predicated region
    $region90: #{tpu_custom_call.1} parent=1 // pred_check
      _
    $region91: #{tpu_custom_call.1} parent=1 // pred_check_branch
      %579 = sbr.rel (0) target = $region93
    $region92: #{tpu_custom_call.1} parent=1 // pred_region
      %580 = dma.done [#allocation15], 32
    $region93: #{tpu_custom_call.1} parent=1 // pred_fallthru
      _
    // Predicated region
    $region94: #{tpu_custom_call.1} parent=1 // pred_check
      _
    $region95: #{tpu_custom_call.1} parent=1 // pred_check_branch
      %582 = sbr.rel (0) target = $region97
    $region96: #{tpu_custom_call.1} parent=1 // pred_region
      %583 = dma.done [#allocation15], 32
    $region97: #{tpu_custom_call.1} parent=1 // pred_fallthru
      _
    // Predicated region
    $region98: #{tpu_custom_call.1} parent=1 // pred_check
      _
    $region99: #{tpu_custom_call.1} parent=1 // pred_check_branch
      %585 = sbr.rel (0) target = $region101
    $region100: #{tpu_custom_call.1} parent=1 // pred_region
      %586 = dma.done [#allocation18], 32
    $region101: #{tpu_custom_call.1} parent=1 // pred_fallthru
      _
    %587 = vsyncpa [#allocation3], 1
    %588 = vsyncpa [#allocation6], 1
    %589 = vsyncpa [#allocation9], 1
    %590 = vsyncpa [#allocation12], 1
    %591 = vsyncpa [#allocation4], 1
    %592 = vsyncpa [#allocation15], 1
    %593 = vsyncpa [#allocation18], 1

</llo_original>
